<compile_context>
chip_gen: v6e
topology: v6e:2x2x1
jax: 0.10.0
libtpu: 0.0.40
codegen_flags: <defaults>
</compile_context>

<pallas_src>
import functools

import jax
import jax.numpy as jnp
from jax.experimental import pallas as pl
from jax.experimental.pallas import tpu as pltpu

LANE = 128  # lane-dense padded width for the action head


def _round_up(x, m):
    return (x + m - 1) // m * m


def _num_tensorcores():
    """2 TensorCores per chip on v7x; 1 on v5e/v6e. Conservative fallback: 1."""
    try:
        kind = jax.devices()[0].device_kind.lower()
        if "v7" in kind:
            return 2
    except Exception:
        pass
    return 1


def actor_mlp_kernel(x_ref, w1_ref, b1_ref, w2_ref, b2_ref, w3_ref, b3_ref,
                     mean_ref):
    # in-kernel cast: f32 state tile -> bf16 MXU operand (no wrapper cast op)
    x = x_ref[...].astype(jnp.bfloat16)
    # fc1 + ReLU   (bf16 operands, f32 MXU accumulation, f32 bias add)
    h1 = jnp.dot(x, w1_ref[...], preferred_element_type=jnp.float32)
    h1 = jnp.maximum(h1 + b1_ref[...], 0.0).astype(jnp.bfloat16)
    # fc2 + ReLU
    h2 = jnp.dot(h1, w2_ref[...], preferred_element_type=jnp.float32)
    h2 = jnp.maximum(h2 + b2_ref[...], 0.0).astype(jnp.bfloat16)
    # fc3 + Tanh in f32 (EUP); lane-dense padded bf16 store (wrapper slices to A)
    h3 = jnp.dot(h2, w3_ref[...], preferred_element_type=jnp.float32)
    mean_ref[...] = jnp.tanh(h3 + b3_ref[...]).astype(mean_ref.dtype)


def _actor_mean(state, params, *, action_dim, num_tiles):
    """3-layer MLP over the batch. Generation-aware batch tiling."""
    w1, b1, w2, b2, w3, b3 = params
    B, in_dim = state.shape
    a_pad = w3.shape[1]                      # action head padded to LANE

    # One tile on single-TC chips (v5e/v6e): block == full array, no padding,
    # no per-step grid overhead.  On v7x, split the batch into `num_tiles`
    # "parallel" tiles (one per TensorCore); pad by at most 16*n - 1 rows.
    n = num_tiles if (num_tiles > 1 and B >= 32 * num_tiles) else 1
    if n == 1:
        b_pad, tb = B, B
    else:
        b_pad = _round_up(B, 16 * n)
        tb = b_pad // n

    x = state
    if b_pad != B:
        x = jnp.pad(x, ((0, b_pad - B), (0, 0)))

    # Constant block index -> weights/biases stay VMEM-resident across steps.
    resident = lambda arr: pl.BlockSpec(arr.shape, lambda i: (0, 0))

    mean = pl.pallas_call(
        actor_mlp_kernel,
        out_shape=jax.ShapeDtypeStruct((b_pad, a_pad), jnp.bfloat16),
        grid=(b_pad // tb,),
        in_specs=[
            pl.BlockSpec((tb, in_dim), lambda i: (i, 0)),   # state tile (f32)
            resident(w1), resident(b1),
            resident(w2), resident(b2),
            resident(w3), resident(b3),
        ],
        out_specs=pl.BlockSpec((tb, a_pad), lambda i: (i, 0)),
        compiler_params=pltpu.CompilerParams(
            dimension_semantics=("parallel",)),
    )(x, w1, b1, w2, b2, w3, b3)

    # Slice off batch/lane padding + upcast inside the same jit as the kernel.
    return mean[:B, :action_dim].astype(jnp.float32)


def make_actor_forward(params, action_var):
    """Returns forward(state) -> (action_mean [B, A] f32, cov_mat [1, A, A]).

    These are the parameters of the MultivariateNormal the torch module builds.
    cov_mat is constant for a given action_std, so it is computed once here.
    """
    action_dim = int(action_var.shape[0])
    cov_mat = jnp.diag(action_var)[None, :, :]
    mean_fn = jax.jit(functools.partial(
        _actor_mean, action_dim=action_dim, num_tiles=_num_tensorcores()))

    def forward(state):
        # TODO(synk): the MultivariateNormal distribution object itself
        # (sampling / log_prob) is not a tensor op; we return its parameters.
        return mean_fn(state, params), cov_mat

    return forward


def init_params(key, input_dim, fc1_dims, fc2_dims, action_dim):
    """Deterministic init matching the PyTorch layer shapes.

    torch stores Linear weight as [out, in]; we store the transpose [in, out],
    cast to bf16 (deliberate precision choice for the MXU), and zero-pad the
    final layer's output width to a lane-dense 128 (tanh(0)=0 in the pad).
    """
    ks = jax.random.split(key, 6)
    a_pad = max(LANE, _round_up(action_dim, LANE))

    def linear(kw, kb, fan_in, fan_out, pad_to=None):
        bound = 1.0 / jnp.sqrt(fan_in)
        w = jax.random.uniform(kw, (fan_in, fan_out), jnp.float32, -bound, bound)
        b = jax.random.uniform(kb, (1, fan_out), jnp.float32, -bound, bound)
        if pad_to is not None and pad_to > fan_out:
            w = jnp.pad(w, ((0, 0), (0, pad_to - fan_out)))
            b = jnp.pad(b, ((0, 0), (0, pad_to - fan_out)))
        return w.astype(jnp.bfloat16), b          # weights bf16, biases f32

    w1, b1 = linear(ks[0], ks[1], input_dim, fc1_dims)
    w2, b2 = linear(ks[2], ks[3], fc1_dims, fc2_dims)
    w3, b3 = linear(ks[4], ks[5], fc2_dims, action_dim, pad_to=a_pad)
    return (w1, b1, w2, b2, w3, b3)


def ref_forward(state, params):
    """Pure-JAX reference matching the kernel's bf16 rounding points."""
    w1, b1, w2, b2, w3, b3 = params
    f32 = lambda t: t.astype(jnp.float32)
    x = f32(state.astype(jnp.bfloat16))
    h1 = jnp.maximum(x @ f32(w1) + b1, 0.0)
    h1 = f32(h1.astype(jnp.bfloat16))
    h2 = jnp.maximum(h1 @ f32(w2) + b2, 0.0)
    h2 = f32(h2.astype(jnp.bfloat16))
    out = jnp.tanh(h2 @ f32(w3) + b3)
    return f32(out.astype(jnp.bfloat16))          # kernel output is bf16


if __name__ == "__main__":
    # Small PPO-style rollout minibatch.
    batch = 64
    input_dim = 32        # input_dims = (32,)
    fc1_dims = 256
    fc2_dims = 256
    action_dim = 8        # action_dim = (8,)
    action_std_init = 0.6

    key = jax.random.PRNGKey(0)
    k_state, k_params = jax.random.split(key)

    state = jax.random.normal(k_state, (batch, input_dim), jnp.float32)
    params = init_params(k_params, input_dim, fc1_dims, fc2_dims, action_dim)
    action_var = jnp.full((action_dim,), action_std_init * action_std_init,
                          dtype=jnp.float32)

    forward = make_actor_forward(params, action_var)
    action_mean, cov_mat = forward(state)
    jax.block_until_ready((action_mean, cov_mat))

    # Reference check (same math, bf16 rounding points matched, no Pallas).
    ref = ref_forward(state, params)[:, :action_dim]

    assert action_mean.shape == (batch, action_dim)
    assert cov_mat.shape == (1, action_dim, action_dim)
    assert jnp.allclose(action_mean, ref, atol=2e-2, rtol=2e-2), \
        float(jnp.max(jnp.abs(action_mean - ref)))
    # Sanity: still close to the full-f32 PyTorch-style forward.
    w1, b1, w2, b2, w3, b3 = params
    ref_f32 = jnp.tanh(
        jnp.maximum(jnp.maximum(state @ w1.astype(jnp.float32) + b1, 0.0)
                    @ w2.astype(jnp.float32) + b2, 0.0)
        @ w3.astype(jnp.float32) + b3)[:, :action_dim]
    assert jnp.allclose(action_mean, ref_f32, atol=5e-2, rtol=5e-2)

    print("KERNEL_OK")
</pallas_src>

<mosaic_0001>
module attributes {stable_mosaic.version = 11 : i64} {
  func.func @actor_mlp_kernel(%arg0: i32, %arg1: memref<64x32xf32, #tpu.memory_space<vmem>>, %arg2: memref<32x256xbf16, #tpu.memory_space<vmem>>, %arg3: memref<1x256xf32, #tpu.memory_space<vmem>>, %arg4: memref<256x256xbf16, #tpu.memory_space<vmem>>, %arg5: memref<1x256xf32, #tpu.memory_space<vmem>>, %arg6: memref<256x128xbf16, #tpu.memory_space<vmem>>, %arg7: memref<1x128xf32, #tpu.memory_space<vmem>>, %arg8: memref<64x128xbf16, #tpu.memory_space<vmem>>) attributes {dimension_semantics = [#tpu.dimension_semantics<parallel>], iteration_bounds = array<i64: 1>, scalar_prefetch = 0 : i64, scratch_operands = 0 : i64, tpu.core_type = #tpu.core_type<tc>, window_params = [{transform_indices = @transform_0, window_bounds = array<i64: 64, 32>}, {pipeline_mode = #tpu.pipeline_mode<synchronous>, transform_indices = @transform_1, window_bounds = array<i64: 32, 256>}, {pipeline_mode = #tpu.pipeline_mode<synchronous>, transform_indices = @transform_2, window_bounds = array<i64: 1, 256>}, {pipeline_mode = #tpu.pipeline_mode<synchronous>, transform_indices = @transform_3, window_bounds = array<i64: 256, 256>}, {pipeline_mode = #tpu.pipeline_mode<synchronous>, transform_indices = @transform_4, window_bounds = array<i64: 1, 256>}, {pipeline_mode = #tpu.pipeline_mode<synchronous>, transform_indices = @transform_5, window_bounds = array<i64: 256, 128>}, {pipeline_mode = #tpu.pipeline_mode<synchronous>, transform_indices = @transform_6, window_bounds = array<i64: 1, 128>}, {transform_indices = @transform_7, window_bounds = array<i64: 64, 128>}]} {
    %c0 = arith.constant 0 : index
    %c0_0 = arith.constant 0 : index
    %0 = vector.load %arg1[%c0, %c0_0] : memref<64x32xf32, #tpu.memory_space<vmem>>, vector<64x32xf32>
    %1 = arith.truncf %0 : vector<64x32xf32> to vector<64x32xbf16>
    %c0_1 = arith.constant 0 : index
    %c0_2 = arith.constant 0 : index
    %2 = vector.load %arg2[%c0_1, %c0_2] : memref<32x256xbf16, #tpu.memory_space<vmem>>, vector<32x256xbf16>
    %cst = arith.constant dense<0.000000e+00> : vector<64x256xf32>
    %3 = tpu.matmul %1, %2, %cst {dimension_numbers = #tpu.dot_dimension_numbers<[1], [0], [0], [1], [0, 0, 1, 1], [], []>} : vector<64x32xbf16>, vector<32x256xbf16>, vector<64x256xf32> -> vector<64x256xf32>
    %c0_3 = arith.constant 0 : index
    %c0_4 = arith.constant 0 : index
    %4 = vector.load %arg3[%c0_3, %c0_4] : memref<1x256xf32, #tpu.memory_space<vmem>>, vector<1x256xf32>
    %5 = vector.broadcast %4 : vector<1x256xf32> to vector<64x256xf32>
    %6 = arith.addf %3, %5 : vector<64x256xf32>
    %cst_5 = arith.constant 0.000000e+00 : f32
    %7 = vector.broadcast %cst_5 : f32 to vector<64x256xf32>
    %8 = arith.maximumf %6, %7 : vector<64x256xf32>
    %9 = arith.truncf %8 : vector<64x256xf32> to vector<64x256xbf16>
    %c0_6 = arith.constant 0 : index
    %c0_7 = arith.constant 0 : index
    %10 = vector.load %arg4[%c0_6, %c0_7] : memref<256x256xbf16, #tpu.memory_space<vmem>>, vector<256x256xbf16>
    %cst_8 = arith.constant dense<0.000000e+00> : vector<64x256xf32>
    %11 = tpu.matmul %9, %10, %cst_8 {dimension_numbers = #tpu.dot_dimension_numbers<[1], [0], [0], [1], [0, 0, 1, 1], [], []>} : vector<64x256xbf16>, vector<256x256xbf16>, vector<64x256xf32> -> vector<64x256xf32>
    %c0_9 = arith.constant 0 : index
    %c0_10 = arith.constant 0 : index
    %12 = vector.load %arg5[%c0_9, %c0_10] : memref<1x256xf32, #tpu.memory_space<vmem>>, vector<1x256xf32>
    %13 = vector.broadcast %12 : vector<1x256xf32> to vector<64x256xf32>
    %14 = arith.addf %11, %13 : vector<64x256xf32>
    %cst_11 = arith.constant 0.000000e+00 : f32
    %15 = vector.broadcast %cst_11 : f32 to vector<64x256xf32>
    %16 = arith.maximumf %14, %15 : vector<64x256xf32>
    %17 = arith.truncf %16 : vector<64x256xf32> to vector<64x256xbf16>
    %c0_12 = arith.constant 0 : index
    %c0_13 = arith.constant 0 : index
    %18 = vector.load %arg6[%c0_12, %c0_13] : memref<256x128xbf16, #tpu.memory_space<vmem>>, vector<256x128xbf16>
    %cst_14 = arith.constant dense<0.000000e+00> : vector<64x128xf32>
    %19 = tpu.matmul %17, %18, %cst_14 {dimension_numbers = #tpu.dot_dimension_numbers<[1], [0], [0], [1], [0, 0, 1, 1], [], []>} : vector<64x256xbf16>, vector<256x128xbf16>, vector<64x128xf32> -> vector<64x128xf32>
    %c0_15 = arith.constant 0 : index
    %c0_16 = arith.constant 0 : index
    %20 = vector.load %arg7[%c0_15, %c0_16] : memref<1x128xf32, #tpu.memory_space<vmem>>, vector<1x128xf32>
    %21 = vector.broadcast %20 : vector<1x128xf32> to vector<64x128xf32>
    %22 = arith.addf %19, %21 : vector<64x128xf32>
    %23 = math.tanh %22 : vector<64x128xf32>
    %24 = arith.truncf %23 : vector<64x128xf32> to vector<64x128xbf16>
    %c0_17 = arith.constant 0 : index
    %c0_18 = arith.constant 0 : index
    %25 = vector.load %arg8[%c0_17, %c0_18] : memref<64x128xbf16, #tpu.memory_space<vmem>>, vector<64x128xbf16>
    tpu.vector_store %arg8[%c0_17, %c0_18], %24 {strides = array<i32>} : memref<64x128xbf16, #tpu.memory_space<vmem>>, vector<64x128xbf16>,
    return
  }
  func.func @transform_0(%arg0: i32) -> (i32, i32) {
    %c0_i32 = arith.constant 0 : i32
    %c0_i32_0 = arith.constant 0 : i32
    return %arg0, %c0_i32 : i32, i32
  }
  func.func @transform_1(%arg0: i32) -> (i32, i32) {
    %c0_i32 = arith.constant 0 : i32
    %c0_i32_0 = arith.constant 0 : i32
    %c0_i32_1 = arith.constant 0 : i32
    return %c0_i32, %c0_i32_0 : i32, i32
  }
  func.func @transform_2(%arg0: i32) -> (i32, i32) {
    %c0_i32 = arith.constant 0 : i32
    %c0_i32_0 = arith.constant 0 : i32
    %c0_i32_1 = arith.constant 0 : i32
    return %c0_i32, %c0_i32_0 : i32, i32
  }
  func.func @transform_3(%arg0: i32) -> (i32, i32) {
    %c0_i32 = arith.constant 0 : i32
    %c0_i32_0 = arith.constant 0 : i32
    %c0_i32_1 = arith.constant 0 : i32
    return %c0_i32, %c0_i32_0 : i32, i32
  }
  func.func @transform_4(%arg0: i32) -> (i32, i32) {
    %c0_i32 = arith.constant 0 : i32
    %c0_i32_0 = arith.constant 0 : i32
    %c0_i32_1 = arith.constant 0 : i32
    return %c0_i32, %c0_i32_0 : i32, i32
  }
  func.func @transform_5(%arg0: i32) -> (i32, i32) {
    %c0_i32 = arith.constant 0 : i32
    %c0_i32_0 = arith.constant 0 : i32
    %c0_i32_1 = arith.constant 0 : i32
    return %c0_i32, %c0_i32_0 : i32, i32
  }
  func.func @transform_6(%arg0: i32) -> (i32, i32) {
    %c0_i32 = arith.constant 0 : i32
    %c0_i32_0 = arith.constant 0 : i32
    %c0_i32_1 = arith.constant 0 : i32
    return %c0_i32, %c0_i32_0 : i32, i32
  }
  func.func @transform_7(%arg0: i32) -> (i32, i32) {
    %c0_i32 = arith.constant 0 : i32
    %c0_i32_0 = arith.constant 0 : i32
    return %arg0, %c0_i32 : i32, i32
  }
}

</mosaic_0001>

<llo_original>
// kernel: _actor_mean.1
$region0: #{_actor_mean.1}
  #allocation0 [shape = 'u32[]', space=smem, size = 0x4, offset = 0x4, fixed_abs, tag = 'smem constant byte address 0x4 - core index']
  #allocation1 [shape = 'u32[144,128]{1,0:T(1,128)}', space=vmem, size = 0x12000, scoped, tag = 'internal scratch']
  %s0 = inlined_call_operand.vmem [shape: f32[64,32], index: 0, kind: input, shape index: {}]
  %s1 = inlined_call_operand.vmem [shape: bf16[32,256], index: 1, kind: input, shape index: {}]
  %s2 = inlined_call_operand.vmem [shape: f32[1,256], index: 2, kind: input, shape index: {}]
  %s3 = inlined_call_operand.hbm [shape: bf16[256,256], index: 3, kind: input, shape index: {}]
  %s4 = inlined_call_operand.vmem [shape: f32[1,256], index: 4, kind: input, shape index: {}]
  %s5 = inlined_call_operand.hbm [shape: bf16[256,128], index: 5, kind: input, shape index: {}]
  %s6 = inlined_call_operand.vmem [shape: f32[1,128], index: 6, kind: input, shape index: {}]
  %s7 = inlined_call_operand.vmem [shape: bf16[64,128], index: 7, kind: output, shape index: {}]
  %s8 = sld [smem:[#allocation0]]
  $region46: #{_actor_mean.1} parent=0
    _
  %s10 = ssub.s32 1, %s8
  %s11 = scalar_select 0, %s10, %s8
  $region1: #{_actor_mean.1} parent=0
    #allocation2 [shape = 'u8[131072]{0}', space=vmem, size = 0x20000, scoped, tag = 'input window, operand 3, single buffered']
    #allocation3 [shape = 's32[1]{0}', space=sflag, size = 0x4, scoped, tag = 'scoped memory for _actor_mean.1']
    #allocation4 [shape = 'u8[65536]{0}', space=vmem, size = 0x10000, scoped, tag = 'input window, operand 5, single buffered']
    #allocation5 [shape = 's32[1]{0}', space=sflag, size = 0x4, scoped, tag = 'scoped memory for _actor_mean.1']
    %12 = vsyncpa [#allocation3], 0
    %13 = vsyncpa [#allocation5], 0
    // Predicated region
    $region2: #{_actor_mean.1} parent=1 // pred_check
      _
    $region3: #{_actor_mean.1} parent=1 // pred_check_branch
      %15 = sbr.rel (0) target = $region5
    $region4: #{_actor_mean.1} parent=1 // pred_region
      _
    $region5: #{_actor_mean.1} parent=1 // pred_fallthru
      _
    // Predicated region
    $region6: #{_actor_mean.1} parent=1 // pred_check
      _
    $region7: #{_actor_mean.1} parent=1 // pred_check_branch
      %17 = sbr.rel (0) target = $region9
    $region8: #{_actor_mean.1} parent=1 // pred_region
      _
    $region9: #{_actor_mean.1} parent=1 // pred_fallthru
      _
    // Predicated region
    $region10: #{_actor_mean.1} parent=1 // pred_check
      _
    $region11: #{_actor_mean.1} parent=1 // pred_check_branch
      %19 = sbr.rel (0) target = $region13
    $region12: #{_actor_mean.1} parent=1 // pred_region
      _
    $region13: #{_actor_mean.1} parent=1 // pred_fallthru
      _
    // Predicated region
    $region14: #{_actor_mean.1} parent=1 // pred_check
      _
    $region15: #{_actor_mean.1} parent=1 // pred_check_branch
      %21 = sbr.rel (0) target = $region17
    $region16: #{_actor_mean.1} parent=1 // pred_region
      %s23 = ssub.s32 4096, 4096
      %24 = vsyncadd [#allocation3], %s23
      %s25 = sshll.u32 [#allocation2], 4
      %s26 = int_to_ptr.vmem [resolvable:$true] %s25
      %31 = dma.hbm_to_vmem [thread:$0]  %s3, 4096, %s26, [#allocation3], 128, 128, 8
    $region17: #{_actor_mean.1} parent=1 // pred_fallthru
      _
    // Predicated region
    $region18: #{_actor_mean.1} parent=1 // pred_check
      _
    $region19: #{_actor_mean.1} parent=1 // pred_check_branch
      %33 = sbr.rel (0) target = $region21
    $region20: #{_actor_mean.1} parent=1 // pred_region
      _
    $region21: #{_actor_mean.1} parent=1 // pred_fallthru
      _
    // Predicated region
    $region22: #{_actor_mean.1} parent=1 // pred_check
      _
    $region23: #{_actor_mean.1} parent=1 // pred_check_branch
      %35 = sbr.rel (0) target = $region25
    $region24: #{_actor_mean.1} parent=1 // pred_region
      %s37 = ssub.s32 2048, 2048
      %38 = vsyncadd [#allocation5], %s37
      %s39 = sshll.u32 [#allocation4], 4
      %s40 = int_to_ptr.vmem [resolvable:$true] %s39
      %45 = dma.hbm_to_vmem [thread:$0]  %s5, 2048, %s40, [#allocation5], 64, 64, 4
    $region25: #{_actor_mean.1} parent=1 // pred_fallthru
      _
    // Predicated region
    $region26: #{_actor_mean.1} parent=1 // pred_check
      _
    $region27: #{_actor_mean.1} parent=1 // pred_check_branch
      %47 = sbr.rel (0) target = $region29
    $region28: #{_actor_mean.1} parent=1 // pred_region
      _
    $region29: #{_actor_mean.1} parent=1 // pred_fallthru
      _
    // Predicated region
    $region30: #{_actor_mean.1} parent=1 // pred_check
      _
    $region31: #{_actor_mean.1} parent=1 // pred_check_branch
      %49 = sbr.rel (0) target = $region33
    $region32: #{_actor_mean.1} parent=1 // pred_region
      %50 = dma.done [#allocation3], 4096
    $region33: #{_actor_mean.1} parent=1 // pred_fallthru
      _
    // Predicated region
    $region34: #{_actor_mean.1} parent=1 // pred_check
      _
    $region35: #{_actor_mean.1} parent=1 // pred_check_branch
      %52 = sbr.rel (0) target = $region37
    $region36: #{_actor_mean.1} parent=1 // pred_region
      %53 = dma.done [#allocation5], 2048
    $region37: #{_actor_mean.1} parent=1 // pred_fallthru
      _
    %v55 = vld [vmem:[%s0] sm:$0xff]
    %v56 = vld [vmem:[%s0 + $0x8] sm:$0xff]
    %v57 = vld [vmem:[%s0 + $0x10] sm:$0xff]
    %v58 = vld [vmem:[%s0 + $0x18] sm:$0xff]
    %v59 = vld [vmem:[%s0 + $0x20] sm:$0xff]
    %v60 = vld [vmem:[%s0 + $0x28] sm:$0xff]
    %v61 = vld [vmem:[%s0 + $0x30] sm:$0xff]
    %v62 = vld [vmem:[%s0 + $0x38] sm:$0xff]
    %v63 = vpack.c.bf16 %v56, %v55
    %v64 = vpack.c.bf16 %v58, %v57
    %v65 = vpack.c.bf16 %v60, %v59
    %v66 = vpack.c.bf16 %v62, %v61
    %v67 = vld [vmem:[%s1] sm:$0xff]
    %v68 = vld [vmem:[%s1 + $0x8] sm:$0xff]
    %v69 = vld [vmem:[%s1 + $0x10] sm:$0xff]
    %v70 = vld [vmem:[%s1 + $0x18] sm:$0xff]
    %v71 = vld [vmem:[%s2] sm:$0x3]
    %v73 = vlaneseq
    %v74 = vshrl.u32 %v73, 7
    %v75 = vsub.s32 0, %v74
    %v76 = vrot.slane %v71, %v75
    %v77 = vlaneseq
    %v78 = vshrl.u32 %v77, 7
    %v79 = vsub.s32 1, %v78
    %v80 = vrot.slane %v71, %v79
    %v87 = vunpack.c.l.b16 %v67
    %v88 = vunpack.c.h.b16 %v67
    %v89 = vunpack.c.l.b16 %v68
    %v90 = vunpack.c.h.b16 %v68
    %v91 = vunpack.c.l.b16 %v69
    %v92 = vunpack.c.h.b16 %v69
    %v93 = vunpack.c.l.b16 %v70
    %v94 = vunpack.c.h.b16 %v70
    %v95 = vpack.c.b16 %v89, %v87
    %v96 = vpack.c.b16 %v90, %v88
    %v97 = vpack.c.b16 %v93, %v91
    %v98 = vpack.c.b16 %v94, %v92
    %vm103 = vcmask 261120
    %v105 = vsel %vm103, %v63, 0
    %v108 = vsel %vm103, %v64, 0
    %v111 = vsel %vm103, %v65, 0
    %v114 = vsel %vm103, %v66, 0
    %116 = vmatprep.subr.bf16.mxu0 0
    %117 = vmatpush1.bf16.msra.mxu0 0
    %118 = vmatprep.subr.bf16.mxu0 0
    %119 = vmatpush1.bf16.msra.mxu0 0
    %120 = vmatprep.subr.bf16.mxu0 0
    %121 = vmatpush1.bf16.msra.mxu0 0
    %122 = vmatprep.subr.bf16.mxu0 0
    %123 = vmatpush1.bf16.msra.mxu0 0
    %124 = vmatprep.subr.bf16.mxu0 0
    %125 = vmatpush1.bf16.msra.mxu0 0
    %126 = vmatprep.subr.bf16.mxu0 0
    %127 = vmatpush1.bf16.msra.mxu0 0
    %128 = vmatprep.subr.bf16.mxu0 %v98
    %129 = vmatpush1.bf16.msra.mxu0 %v97
    %130 = vmatprep.subr.bf16.mxu0 %v96
    %131 = vmatpush1.bf16.msra.mxu0 %v95
    %132 = vmatprep.subr.bf16.mxu0 0
    %133 = vmatpush2.bf16.msra.mxu0 0
    %134 = vmatprep.subr.bf16.mxu0 0
    %135 = vmatpush2.bf16.msra.mxu0 0
    %136 = vmatprep.subr.bf16.mxu0 0
    %137 = vmatpush2.bf16.msra.mxu0 0
    %138 = vmatprep.subr.bf16.mxu0 0
    %139 = vmatpush2.bf16.msra.mxu0 0
    %140 = vmatprep.subr.bf16.mxu0 0
    %141 = vmatpush2.bf16.msra.mxu0 0
    %142 = vmatprep.subr.bf16.mxu0 0
    %143 = vmatpush2.bf16.msra.mxu0 0
    %144 = vmatprep.subr.bf16.mxu0 0
    %145 = vmatpush2.bf16.msra.mxu0 0
    %146 = vmatprep.subr.bf16.mxu0 0
    %147 = vmatpush2.bf16.msra.mxu0 0
    %148 = vmatprep.mubr.bf16.mxu0 0
    %149 = vmatmul.mubr.bf16.gmra.mxu0 %v105
    %v150 = vpop.f32.mrf.mxu0
    %v151 = vadd.f32 %v76, %v150
    %v152 = vpop.f32.mrf.mxu0
    %v153 = vadd.f32 %v80, %v152
    %v154 = vpop.f32.mrf.mxu0
    %v155 = vadd.f32 %v76, %v154
    %v156 = vpop.f32.mrf.mxu0
    %v157 = vadd.f32 %v80, %v156
    %158 = vmatprep.mubr.bf16.mxu0 0
    %159 = vmatmul.mubr.bf16.gmra.mxu0 %v108
    %v160 = vpop.f32.mrf.mxu0
    %v161 = vadd.f32 %v76, %v160
    %v162 = vpop.f32.mrf.mxu0
    %v163 = vadd.f32 %v80, %v162
    %v164 = vpop.f32.mrf.mxu0
    %v165 = vadd.f32 %v76, %v164
    %v166 = vpop.f32.mrf.mxu0
    %v167 = vadd.f32 %v80, %v166
    %168 = vmatprep.mubr.bf16.mxu0 0
    %169 = vmatmul.mubr.bf16.gmra.mxu0 %v111
    %v170 = vpop.f32.mrf.mxu0
    %v171 = vadd.f32 %v76, %v170
    %v172 = vpop.f32.mrf.mxu0
    %v173 = vadd.f32 %v80, %v172
    %v174 = vpop.f32.mrf.mxu0
    %v175 = vadd.f32 %v76, %v174
    %v176 = vpop.f32.mrf.mxu0
    %v177 = vadd.f32 %v80, %v176
    %178 = vmatprep.mubr.bf16.mxu0 0
    %179 = vmatmul.mubr.bf16.gmra.mxu0 %v114
    %v180 = vpop.f32.mrf.mxu0
    %v181 = vadd.f32 %v76, %v180
    %v182 = vpop.f32.mrf.mxu0
    %v183 = vadd.f32 %v80, %v182
    %v184 = vpop.f32.mrf.mxu0
    %v185 = vadd.f32 %v76, %v184
    %v186 = vpop.f32.mrf.mxu0
    %v187 = vadd.f32 %v80, %v186
    %188 = vdwg.mxu0
    %v189 = vmax.f32 %v151, 0.0
    %v190 = vmax.f32 %v153, 0.0
    %v191 = vmax.f32 %v155, 0.0
    %v192 = vmax.f32 %v157, 0.0
    %v193 = vmax.f32 %v161, 0.0
    %v194 = vmax.f32 %v163, 0.0
    %v195 = vmax.f32 %v165, 0.0
    %v196 = vmax.f32 %v167, 0.0
    %v197 = vmax.f32 %v171, 0.0
    %v198 = vmax.f32 %v173, 0.0
    %v199 = vmax.f32 %v175, 0.0
    %v200 = vmax.f32 %v177, 0.0
    %v201 = vmax.f32 %v181, 0.0
    %v202 = vmax.f32 %v183, 0.0
    %v203 = vmax.f32 %v185, 0.0
    %v204 = vmax.f32 %v187, 0.0
    %v205 = vpack.c.bf16 %v191, %v189
    %v206 = vpack.c.bf16 %v192, %v190
    %v207 = vpack.c.bf16 %v195, %v193
    %v208 = vpack.c.bf16 %v196, %v194
    %v209 = vpack.c.bf16 %v199, %v197
    %v210 = vpack.c.bf16 %v200, %v198
    %v211 = vpack.c.bf16 %v203, %v201
    %v212 = vpack.c.bf16 %v204, %v202
    %v213 = vld [vmem:[#allocation2] sm:$0xff]
    %v214 = vld [vmem:[#allocation2 + $0x8] sm:$0xff]
    %v215 = vld [vmem:[#allocation2 + $0x10] sm:$0xff]
    %v216 = vld [vmem:[#allocation2 + $0x18] sm:$0xff]
    %v217 = vld [vmem:[#allocation2 + $0x20] sm:$0xff]
    %v218 = vld [vmem:[#allocation2 + $0x28] sm:$0xff]
    %v219 = vld [vmem:[#allocation2 + $0x30] sm:$0xff]
    %v220 = vld [vmem:[#allocation2 + $0x38] sm:$0xff]
    %v221 = vld [vmem:[#allocation2 + $0x40] sm:$0xff]
    %v222 = vld [vmem:[#allocation2 + $0x48] sm:$0xff]
    %v223 = vld [vmem:[#allocation2 + $0x50] sm:$0xff]
    %v224 = vld [vmem:[#allocation2 + $0x58] sm:$0xff]
    %v225 = vld [vmem:[#allocation2 + $0x60] sm:$0xff]
    %v226 = vld [vmem:[#allocation2 + $0x68] sm:$0xff]
    %v227 = vld [vmem:[#allocation2 + $0x70] sm:$0xff]
    %v228 = vld [vmem:[#allocation2 + $0x78] sm:$0xff]
    %v229 = vld [vmem:[#allocation2 + $0x80] sm:$0xff]
    %v230 = vld [vmem:[#allocation2 + $0x88] sm:$0xff]
    %v231 = vld [vmem:[#allocation2 + $0x90] sm:$0xff]
    %v232 = vld [vmem:[#allocation2 + $0x98] sm:$0xff]
    %v233 = vld [vmem:[#allocation2 + $0xa0] sm:$0xff]
    %v234 = vld [vmem:[#allocation2 + $0xa8] sm:$0xff]
    %v235 = vld [vmem:[#allocation2 + $0xb0] sm:$0xff]
    %v236 = vld [vmem:[#allocation2 + $0xb8] sm:$0xff]
    %v237 = vld [vmem:[#allocation2 + $0xc0] sm:$0xff]
    %v238 = vld [vmem:[#allocation2 + $0xc8] sm:$0xff]
    %v239 = vld [vmem:[#allocation2 + $0xd0] sm:$0xff]
    %v240 = vld [vmem:[#allocation2 + $0xd8] sm:$0xff]
    %v241 = vld [vmem:[#allocation2 + $0xe0] sm:$0xff]
    %v242 = vld [vmem:[#allocation2 + $0xe8] sm:$0xff]
    %v243 = vld [vmem:[#allocation2 + $0xf0] sm:$0xff]
    %v244 = vld [vmem:[#allocation2 + $0xf8] sm:$0xff]
    %v245 = vld [vmem:[%s4] sm:$0x3]
    %v247 = vlaneseq
    %v248 = vshrl.u32 %v247, 7
    %v249 = vsub.s32 0, %v248
    %v250 = vrot.slane %v245, %v249
    %v251 = vlaneseq
    %v252 = vshrl.u32 %v251, 7
    %v253 = vsub.s32 1, %v252
    %v254 = vrot.slane %v245, %v253
    %v289 = vunpack.c.l.b16 %v213
    %v290 = vunpack.c.h.b16 %v213
    %v291 = vunpack.c.l.b16 %v214
    %v292 = vunpack.c.h.b16 %v214
    %v293 = vunpack.c.l.b16 %v215
    %v294 = vunpack.c.h.b16 %v215
    %v295 = vunpack.c.l.b16 %v216
    %v296 = vunpack.c.h.b16 %v216
    %v297 = vunpack.c.l.b16 %v217
    %v298 = vunpack.c.h.b16 %v217
    %v299 = vunpack.c.l.b16 %v218
    %v300 = vunpack.c.h.b16 %v218
    %v301 = vunpack.c.l.b16 %v219
    %v302 = vunpack.c.h.b16 %v219
    %v303 = vunpack.c.l.b16 %v220
    %v304 = vunpack.c.h.b16 %v220
    %v305 = vunpack.c.l.b16 %v221
    %v306 = vunpack.c.h.b16 %v221
    %v307 = vunpack.c.l.b16 %v222
    %v308 = vunpack.c.h.b16 %v222
    %v309 = vunpack.c.l.b16 %v223
    %v310 = vunpack.c.h.b16 %v223
    %v311 = vunpack.c.l.b16 %v224
    %v312 = vunpack.c.h.b16 %v224
    %v313 = vunpack.c.l.b16 %v225
    %v314 = vunpack.c.h.b16 %v225
    %v315 = vunpack.c.l.b16 %v226
    %v316 = vunpack.c.h.b16 %v226
    %v317 = vunpack.c.l.b16 %v227
    %v318 = vunpack.c.h.b16 %v227
    %v319 = vunpack.c.l.b16 %v228
    %v320 = vunpack.c.h.b16 %v228
    %v321 = vunpack.c.l.b16 %v229
    %v322 = vunpack.c.h.b16 %v229
    %v323 = vunpack.c.l.b16 %v230
    %v324 = vunpack.c.h.b16 %v230
    %v325 = vunpack.c.l.b16 %v231
    %v326 = vunpack.c.h.b16 %v231
    %v327 = vunpack.c.l.b16 %v232
    %v328 = vunpack.c.h.b16 %v232
    %v329 = vunpack.c.l.b16 %v233
    %v330 = vunpack.c.h.b16 %v233
    %v331 = vunpack.c.l.b16 %v234
    %v332 = vunpack.c.h.b16 %v234
    %v333 = vunpack.c.l.b16 %v235
    %v334 = vunpack.c.h.b16 %v235
    %v335 = vunpack.c.l.b16 %v236
    %v336 = vunpack.c.h.b16 %v236
    %v337 = vunpack.c.l.b16 %v237
    %v338 = vunpack.c.h.b16 %v237
    %v339 = vunpack.c.l.b16 %v238
    %v340 = vunpack.c.h.b16 %v238
    %v341 = vunpack.c.l.b16 %v239
    %v342 = vunpack.c.h.b16 %v239
    %v343 = vunpack.c.l.b16 %v240
    %v344 = vunpack.c.h.b16 %v240
    %v345 = vunpack.c.l.b16 %v241
    %v346 = vunpack.c.h.b16 %v241
    %v347 = vunpack.c.l.b16 %v242
    %v348 = vunpack.c.h.b16 %v242
    %v349 = vunpack.c.l.b16 %v243
    %v350 = vunpack.c.h.b16 %v243
    %v351 = vunpack.c.l.b16 %v244
    %v352 = vunpack.c.h.b16 %v244
    %v353 = vpack.c.b16 %v291, %v289
    %v354 = vpack.c.b16 %v292, %v290
    %v355 = vpack.c.b16 %v295, %v293
    %v356 = vpack.c.b16 %v296, %v294
    %v357 = vpack.c.b16 %v299, %v297
    %v358 = vpack.c.b16 %v300, %v298
    %v359 = vpack.c.b16 %v303, %v301
    %v360 = vpack.c.b16 %v304, %v302
    %v361 = vpack.c.b16 %v307, %v305
    %v362 = vpack.c.b16 %v308, %v306
    %v363 = vpack.c.b16 %v311, %v309
    %v364 = vpack.c.b16 %v312, %v310
    %v365 = vpack.c.b16 %v315, %v313
    %v366 = vpack.c.b16 %v316, %v314
    %v367 = vpack.c.b16 %v319, %v317
    %v368 = vpack.c.b16 %v320, %v318
    %v369 = vpack.c.b16 %v323, %v321
    %v370 = vpack.c.b16 %v324, %v322
    %v371 = vpack.c.b16 %v327, %v325
    %v372 = vpack.c.b16 %v328, %v326
    %v373 = vpack.c.b16 %v331, %v329
    %v374 = vpack.c.b16 %v332, %v330
    %v375 = vpack.c.b16 %v335, %v333
    %v376 = vpack.c.b16 %v336, %v334
    %v377 = vpack.c.b16 %v339, %v337
    %v378 = vpack.c.b16 %v340, %v338
    %v379 = vpack.c.b16 %v343, %v341
    %v380 = vpack.c.b16 %v344, %v342
    %v381 = vpack.c.b16 %v347, %v345
    %v382 = vpack.c.b16 %v348, %v346
    %v383 = vpack.c.b16 %v351, %v349
    %v384 = vpack.c.b16 %v352, %v350
    %417 = vmatprep.subr.bf16.mxu0 %v368
    %418 = vmatpush1.bf16.msra.mxu0 %v367
    %419 = vmatprep.subr.bf16.mxu0 %v366
    %420 = vmatpush1.bf16.msra.mxu0 %v365
    %421 = vmatprep.subr.bf16.mxu0 %v364
    %422 = vmatpush1.bf16.msra.mxu0 %v363
    %423 = vmatprep.subr.bf16.mxu0 %v362
    %424 = vmatpush1.bf16.msra.mxu0 %v361
    %425 = vmatprep.subr.bf16.mxu0 %v360
    %426 = vmatpush1.bf16.msra.mxu0 %v359
    %427 = vmatprep.subr.bf16.mxu0 %v358
    %428 = vmatpush1.bf16.msra.mxu0 %v357
    %429 = vmatprep.subr.bf16.mxu0 %v356
    %430 = vmatpush1.bf16.msra.mxu0 %v355
    %431 = vmatprep.subr.bf16.mxu0 %v354
    %432 = vmatpush1.bf16.msra.mxu0 %v353
    %433 = vmatprep.subr.bf16.mxu0 %v384
    %434 = vmatpush2.bf16.msra.mxu0 %v383
    %435 = vmatprep.subr.bf16.mxu0 %v382
    %436 = vmatpush2.bf16.msra.mxu0 %v381
    %437 = vmatprep.subr.bf16.mxu0 %v380
    %438 = vmatpush2.bf16.msra.mxu0 %v379
    %439 = vmatprep.subr.bf16.mxu0 %v378
    %440 = vmatpush2.bf16.msra.mxu0 %v377
    %441 = vmatprep.subr.bf16.mxu0 %v376
    %442 = vmatpush2.bf16.msra.mxu0 %v375
    %443 = vmatprep.subr.bf16.mxu0 %v374
    %444 = vmatpush2.bf16.msra.mxu0 %v373
    %445 = vmatprep.subr.bf16.mxu0 %v372
    %446 = vmatpush2.bf16.msra.mxu0 %v371
    %447 = vmatprep.subr.bf16.mxu0 %v370
    %448 = vmatpush2.bf16.msra.mxu0 %v369
    %449 = vmatprep.mubr.bf16.mxu0 %v206
    %450 = vmatmul.mubr.bf16.gmra.mxu0 %v205
    %v451 = vpop.f32.mrf.mxu0
    %v452 = vadd.f32 %v250, %v451
    %v453 = vpop.f32.mrf.mxu0
    %v454 = vadd.f32 %v254, %v453
    %v455 = vpop.f32.mrf.mxu0
    %v456 = vadd.f32 %v250, %v455
    %v457 = vpop.f32.mrf.mxu0
    %v458 = vadd.f32 %v254, %v457
    %459 = vmatprep.mubr.bf16.mxu0 %v208
    %460 = vmatmul.mubr.bf16.gmra.mxu0 %v207
    %v461 = vpop.f32.mrf.mxu0
    %v462 = vadd.f32 %v250, %v461
    %v463 = vpop.f32.mrf.mxu0
    %v464 = vadd.f32 %v254, %v463
    %v465 = vpop.f32.mrf.mxu0
    %v466 = vadd.f32 %v250, %v465
    %v467 = vpop.f32.mrf.mxu0
    %v468 = vadd.f32 %v254, %v467
    %469 = vmatprep.mubr.bf16.mxu0 %v210
    %470 = vmatmul.mubr.bf16.gmra.mxu0 %v209
    %v471 = vpop.f32.mrf.mxu0
    %v472 = vadd.f32 %v250, %v471
    %v473 = vpop.f32.mrf.mxu0
    %v474 = vadd.f32 %v254, %v473
    %v475 = vpop.f32.mrf.mxu0
    %v476 = vadd.f32 %v250, %v475
    %v477 = vpop.f32.mrf.mxu0
    %v478 = vadd.f32 %v254, %v477
    %479 = vmatprep.mubr.bf16.mxu0 %v212
    %480 = vmatmul.mubr.bf16.gmra.mxu0 %v211
    %v481 = vpop.f32.mrf.mxu0
    %v482 = vadd.f32 %v250, %v481
    %v483 = vpop.f32.mrf.mxu0
    %v484 = vadd.f32 %v254, %v483
    %v485 = vpop.f32.mrf.mxu0
    %v486 = vadd.f32 %v250, %v485
    %v487 = vpop.f32.mrf.mxu0
    %v488 = vadd.f32 %v254, %v487
    %489 = vdwg.mxu0
    %v490 = vmax.f32 %v452, 0.0
    %v491 = vmax.f32 %v454, 0.0
    %v492 = vmax.f32 %v456, 0.0
    %v493 = vmax.f32 %v458, 0.0
    %v494 = vmax.f32 %v462, 0.0
    %v495 = vmax.f32 %v464, 0.0
    %v496 = vmax.f32 %v466, 0.0
    %v497 = vmax.f32 %v468, 0.0
    %v498 = vmax.f32 %v472, 0.0
    %v499 = vmax.f32 %v474, 0.0
    %v500 = vmax.f32 %v476, 0.0
    %v501 = vmax.f32 %v478, 0.0
    %v502 = vmax.f32 %v482, 0.0
    %v503 = vmax.f32 %v484, 0.0
    %v504 = vmax.f32 %v486, 0.0
    %v505 = vmax.f32 %v488, 0.0
    %v506 = vpack.c.bf16 %v492, %v490
    %v507 = vpack.c.bf16 %v493, %v491
    %v508 = vpack.c.bf16 %v496, %v494
    %v509 = vpack.c.bf16 %v497, %v495
    %v510 = vpack.c.bf16 %v500, %v498
    %v511 = vpack.c.bf16 %v501, %v499
    %v512 = vpack.c.bf16 %v504, %v502
    %v513 = vpack.c.bf16 %v505, %v503
    %v514 = vld [vmem:[#allocation4] sm:$0xf]
    %v515 = vld [vmem:[#allocation4 + $0x4] sm:$0xf]
    %v516 = vld [vmem:[#allocation4 + $0x8] sm:$0xf]
    %v517 = vld [vmem:[#allocation4 + $0xc] sm:$0xf]
    %v518 = vld [vmem:[#allocation4 + $0x10] sm:$0xf]
    %v519 = vld [vmem:[#allocation4 + $0x14] sm:$0xf]
    %v520 = vld [vmem:[#allocation4 + $0x18] sm:$0xf]
    %v521 = vld [vmem:[#allocation4 + $0x1c] sm:$0xf]
    %v522 = vld [vmem:[#allocation4 + $0x20] sm:$0xf]
    %v523 = vld [vmem:[#allocation4 + $0x24] sm:$0xf]
    %v524 = vld [vmem:[#allocation4 + $0x28] sm:$0xf]
    %v525 = vld [vmem:[#allocation4 + $0x2c] sm:$0xf]
    %v526 = vld [vmem:[#allocation4 + $0x30] sm:$0xf]
    %v527 = vld [vmem:[#allocation4 + $0x34] sm:$0xf]
    %v528 = vld [vmem:[#allocation4 + $0x38] sm:$0xf]
    %v529 = vld [vmem:[#allocation4 + $0x3c] sm:$0xf]
    %v530 = vld [vmem:[#allocation4 + $0x40] sm:$0xf]
    %v531 = vld [vmem:[#allocation4 + $0x44] sm:$0xf]
    %v532 = vld [vmem:[#allocation4 + $0x48] sm:$0xf]
    %v533 = vld [vmem:[#allocation4 + $0x4c] sm:$0xf]
    %v534 = vld [vmem:[#allocation4 + $0x50] sm:$0xf]
    %v535 = vld [vmem:[#allocation4 + $0x54] sm:$0xf]
    %v536 = vld [vmem:[#allocation4 + $0x58] sm:$0xf]
    %v537 = vld [vmem:[#allocation4 + $0x5c] sm:$0xf]
    %v538 = vld [vmem:[#allocation4 + $0x60] sm:$0xf]
    %v539 = vld [vmem:[#allocation4 + $0x64] sm:$0xf]
    %v540 = vld [vmem:[#allocation4 + $0x68] sm:$0xf]
    %v541 = vld [vmem:[#allocation4 + $0x6c] sm:$0xf]
    %v542 = vld [vmem:[#allocation4 + $0x70] sm:$0xf]
    %v543 = vld [vmem:[#allocation4 + $0x74] sm:$0xf]
    %v544 = vld [vmem:[#allocation4 + $0x78] sm:$0xf]
    %v545 = vld [vmem:[#allocation4 + $0x7c] sm:$0xf]
    %v546 = vld [vmem:[%s6] sm:$0x1]
    %v548 = vlaneseq
    %v549 = vshrl.u32 %v548, 7
    %v550 = vsub.s32 0, %v549
    %v551 = vrot.slane %v546, %v550
    %v585 = vunpack.c.l.b16 %v514
    %v586 = vunpack.c.l.b16 %v515
    %v587 = vunpack.c.l.b16 %v516
    %v588 = vunpack.c.l.b16 %v517
    %v589 = vunpack.c.l.b16 %v518
    %v590 = vunpack.c.l.b16 %v519
    %v591 = vunpack.c.l.b16 %v520
    %v592 = vunpack.c.l.b16 %v521
    %v593 = vunpack.c.l.b16 %v522
    %v594 = vunpack.c.l.b16 %v523
    %v595 = vunpack.c.l.b16 %v524
    %v596 = vunpack.c.l.b16 %v525
    %v597 = vunpack.c.l.b16 %v526
    %v598 = vunpack.c.l.b16 %v527
    %v599 = vunpack.c.l.b16 %v528
    %v600 = vunpack.c.l.b16 %v529
    %v601 = vunpack.c.l.b16 %v530
    %v602 = vunpack.c.l.b16 %v531
    %v603 = vunpack.c.l.b16 %v532
    %v604 = vunpack.c.l.b16 %v533
    %v605 = vunpack.c.l.b16 %v534
    %v606 = vunpack.c.l.b16 %v535
    %v607 = vunpack.c.l.b16 %v536
    %v608 = vunpack.c.l.b16 %v537
    %v609 = vunpack.c.l.b16 %v538
    %v610 = vunpack.c.l.b16 %v539
    %v611 = vunpack.c.l.b16 %v540
    %v612 = vunpack.c.l.b16 %v541
    %v613 = vunpack.c.l.b16 %v542
    %v614 = vunpack.c.l.b16 %v543
    %v615 = vunpack.c.l.b16 %v544
    %v616 = vunpack.c.l.b16 %v545
    %v617 = vpack.c.b16 %v586, %v585
    %v618 = vpack.c.b16 %v588, %v587
    %v619 = vpack.c.b16 %v590, %v589
    %v620 = vpack.c.b16 %v592, %v591
    %v621 = vpack.c.b16 %v594, %v593
    %v622 = vpack.c.b16 %v596, %v595
    %v623 = vpack.c.b16 %v598, %v597
    %v624 = vpack.c.b16 %v600, %v599
    %v625 = vpack.c.b16 %v602, %v601
    %v626 = vpack.c.b16 %v604, %v603
    %v627 = vpack.c.b16 %v606, %v605
    %v628 = vpack.c.b16 %v608, %v607
    %v629 = vpack.c.b16 %v610, %v609
    %v630 = vpack.c.b16 %v612, %v611
    %v631 = vpack.c.b16 %v614, %v613
    %v632 = vpack.c.b16 %v616, %v615
    %649 = vmatprep.subr.bf16.mxu0 0
    %650 = vmatpush1.bf16.msra.mxu0 %v624
    %651 = vmatprep.subr.bf16.mxu0 0
    %652 = vmatpush1.bf16.msra.mxu0 %v623
    %653 = vmatprep.subr.bf16.mxu0 0
    %654 = vmatpush1.bf16.msra.mxu0 %v622
    %655 = vmatprep.subr.bf16.mxu0 0
    %656 = vmatpush1.bf16.msra.mxu0 %v621
    %657 = vmatprep.subr.bf16.mxu0 0
    %658 = vmatpush1.bf16.msra.mxu0 %v620
    %659 = vmatprep.subr.bf16.mxu0 0
    %660 = vmatpush1.bf16.msra.mxu0 %v619
    %661 = vmatprep.subr.bf16.mxu0 0
    %662 = vmatpush1.bf16.msra.mxu0 %v618
    %663 = vmatprep.subr.bf16.mxu0 0
    %664 = vmatpush1.bf16.msra.mxu0 %v617
    %665 = vmatprep.subr.bf16.mxu0 0
    %666 = vmatpush2.bf16.msra.mxu0 %v632
    %667 = vmatprep.subr.bf16.mxu0 0
    %668 = vmatpush2.bf16.msra.mxu0 %v631
    %669 = vmatprep.subr.bf16.mxu0 0
    %670 = vmatpush2.bf16.msra.mxu0 %v630
    %671 = vmatprep.subr.bf16.mxu0 0
    %672 = vmatpush2.bf16.msra.mxu0 %v629
    %673 = vmatprep.subr.bf16.mxu0 0
    %674 = vmatpush2.bf16.msra.mxu0 %v628
    %675 = vmatprep.subr.bf16.mxu0 0
    %676 = vmatpush2.bf16.msra.mxu0 %v627
    %677 = vmatprep.subr.bf16.mxu0 0
    %678 = vmatpush2.bf16.msra.mxu0 %v626
    %679 = vmatprep.subr.bf16.mxu0 0
    %680 = vmatpush2.bf16.msra.mxu0 %v625
    %681 = vmatprep.mubr.bf16.mxu0 %v507
    %682 = vmatmul.mubr.bf16.gmra.mxu0 %v506
    %v683 = vpop.f32.mrf.mxu0
    %v684 = vadd.f32 %v551, %v683
    %v685 = vpop.f32.mrf.mxu0
    %v686 = vpop.f32.mrf.mxu0
    %v687 = vadd.f32 %v551, %v686
    %v688 = vpop.f32.mrf.mxu0
    %689 = vmatprep.mubr.bf16.mxu0 %v509
    %690 = vmatmul.mubr.bf16.gmra.mxu0 %v508
    %v691 = vpop.f32.mrf.mxu0
    %v692 = vadd.f32 %v551, %v691
    %v693 = vpop.f32.mrf.mxu0
    %v694 = vpop.f32.mrf.mxu0
    %v695 = vadd.f32 %v551, %v694
    %v696 = vpop.f32.mrf.mxu0
    %697 = vmatprep.mubr.bf16.mxu0 %v511
    %698 = vmatmul.mubr.bf16.gmra.mxu0 %v510
    %v699 = vpop.f32.mrf.mxu0
    %v700 = vadd.f32 %v551, %v699
    %v701 = vpop.f32.mrf.mxu0
    %v702 = vpop.f32.mrf.mxu0
    %v703 = vadd.f32 %v551, %v702
    %v704 = vpop.f32.mrf.mxu0
    %705 = vmatprep.mubr.bf16.mxu0 %v513
    %706 = vmatmul.mubr.bf16.gmra.mxu0 %v512
    %v707 = vpop.f32.mrf.mxu0
    %v708 = vadd.f32 %v551, %v707
    %v709 = vpop.f32.mrf.mxu0
    %v710 = vpop.f32.mrf.mxu0
    %v711 = vadd.f32 %v551, %v710
    %v712 = vpop.f32.mrf.mxu0
    %713 = vdwg.mxu0
    %v714 = vtanh.pop %v684
    %v715 = vtanh.pop %v687
    %v716 = vtanh.pop %v692
    %v717 = vtanh.pop %v695
    %v718 = vtanh.pop %v700
    %v719 = vtanh.pop %v703
    %v720 = vtanh.pop %v708
    %v721 = vtanh.pop %v711
    %v722 = vpack.c.bf16 %v715, %v714
    %v723 = vpack.c.bf16 %v717, %v716
    %v724 = vpack.c.bf16 %v719, %v718
    %v725 = vpack.c.bf16 %v721, %v720
    %v730 = vunpack.c.l.b16 %v722
    %v731 = vunpack.c.h.b16 %v722
    %v732 = vunpack.c.l.b16 %v723
    %v733 = vunpack.c.h.b16 %v723
    %v734 = vunpack.c.l.b16 %v724
    %v735 = vunpack.c.h.b16 %v724
    %v736 = vunpack.c.l.b16 %v725
    %v737 = vunpack.c.h.b16 %v725
    %v738 = vpack.c.b16 %v730, %v730
    %v739 = vpack.c.b16 %v731, %v731
    %v740 = vpack.c.b16 %v732, %v732
    %v741 = vpack.c.b16 %v733, %v733
    %v742 = vpack.c.b16 %v734, %v734
    %v743 = vpack.c.b16 %v735, %v735
    %v744 = vpack.c.b16 %v736, %v736
    %v745 = vpack.c.b16 %v737, %v737
    %754 = vst [vmem:[%s7] sm:$0xf] %v738
    %755 = vst [vmem:[%s7 + $0x4] sm:$0xf] %v739
    %756 = vst [vmem:[%s7 + $0x8] sm:$0xf] %v740
    %757 = vst [vmem:[%s7 + $0xc] sm:$0xf] %v741
    %758 = vst [vmem:[%s7 + $0x10] sm:$0xf] %v742
    %759 = vst [vmem:[%s7 + $0x14] sm:$0xf] %v743
    %760 = vst [vmem:[%s7 + $0x18] sm:$0xf] %v744
    %761 = vst [vmem:[%s7 + $0x1c] sm:$0xf] %v745
    // Predicated region
    $region38: #{_actor_mean.1} parent=1 // pred_check
      _
    $region39: #{_actor_mean.1} parent=1 // pred_check_branch
      %763 = sbr.rel (0) target = $region41
    $region40: #{_actor_mean.1} parent=1 // pred_region
      _
    $region41: #{_actor_mean.1} parent=1 // pred_fallthru
      _
    // Predicated region
    $region42: #{_actor_mean.1} parent=1 // pred_check
      _
    $region43: #{_actor_mean.1} parent=1 // pred_check_branch
      %765 = sbr.rel (0) target = $region45
    $region44: #{_actor_mean.1} parent=1 // pred_region
      _
    $region45: #{_actor_mean.1} parent=1 // pred_fallthru
      _
    %766 = vsyncpa [#allocation3], 1
    %767 = vsyncpa [#allocation5], 1

</llo_original>
